<compile_context>
chip_gen: v7x
topology: tpu7x:2x2x1
jax: 0.10.0
libtpu: 0.0.40
codegen_flags: <defaults>
</compile_context>

<pallas_src>
import jax
import jax.numpy as jnp
from jax.experimental import pallas as pl
from jax.experimental.pallas import tpu as pltpu


MAX_UNIQUE = 100       # target_tensor = zeros(100, feat) in the PyTorch module
LANE = 128             # TPU lane width
ROW_MULT = 16          # row-tile multiple (bf16-packing safe; >= f32 sublane 8)
BLOCKDIAG_F_MAX = 64   # below this F one block-diagonal dot fills the MXU depth


def _round_up(x: int, m: int) -> int:
    return ((x + m - 1) // m) * m


def _tpu_tiling_config():
    """Generation-dependent (row-tile cap, vmem_limit_bytes).

    v5e / v6e have 128 MiB VMEM -> big tiles amortize per-grid-step overhead;
    v7x has 64 MiB -> keep the conservative cap.
    """
    try:
        vmem_cap = getattr(pltpu.get_tpu_info(), "vmem_capacity_bytes",
                           64 * 1024 * 1024)
    except Exception:
        vmem_cap = 64 * 1024 * 1024
    if vmem_cap >= 96 * 1024 * 1024:          # v5e / v6e (128 MiB)
        return 1024, 80 * 1024 * 1024
    return 512, 40 * 1024 * 1024              # v7x (64 MiB) / unknown


# ----------------------------------------------------------------------------
# Parameter prep — done ONCE per model (hoisted out of the per-forward path).
# ----------------------------------------------------------------------------
def prepare_interaction_head_params(params, compute_dtype=jnp.bfloat16):
    """Build padded, MXU-ready weight/bias slabs once.

    * F < BLOCKDIAG_F_MAX : one block-diagonal [3F->128, sum(K)->128] slab so a
      single MXU dot computes all three heads (fills the contraction depth).
    * otherwise           : three separate lane-dense [F, K->128] weights for
      per-head dots (no zero off-diagonal FLOPs at production F).
    Weights are cast to `compute_dtype` (bf16: MXU-native on v5e/v6e/v7x);
    biases stay f32 (the bias add happens on the f32 accumulator).
    """
    w_h, b_h = params["w_h"], params["b_h"]
    w_o, b_o = params["w_o"], params["b_o"]
    w_p, b_p = params["w_p"], params["b_p"]
    F = w_h.shape[0]
    Kh, Ko, Kp = w_h.shape[1], w_o.shape[1], w_p.shape[1]
    prep = dict(F=F, Kh=Kh, Ko=Ko, Kp=Kp)

    if F < BLOCKDIAG_F_MAX:
        lanes_in = _round_up(3 * F, LANE)
        lanes_out = _round_up(Kh + Ko + Kp, LANE)
        w_slab = jnp.zeros((lanes_in, lanes_out), compute_dtype)
        w_slab = w_slab.at[0:F, 0:Kh].set(w_h.astype(compute_dtype))
        w_slab = w_slab.at[F:2 * F, Kh:Kh + Ko].set(w_o.astype(compute_dtype))
        w_slab = w_slab.at[2 * F:3 * F, Kh + Ko:Kh + Ko + Kp].set(
            w_p.astype(compute_dtype))
        b_slab = jnp.zeros((1, lanes_out), jnp.float32)
        b_slab = b_slab.at[:, 0:Kh].set(b_h.reshape(1, Kh).astype(jnp.float32))
        b_slab = b_slab.at[:, Kh:Kh + Ko].set(
            b_o.reshape(1, Ko).astype(jnp.float32))
        b_slab = b_slab.at[:, Kh + Ko:Kh + Ko + Kp].set(
            b_p.reshape(1, Kp).astype(jnp.float32))
        prep.update(mode="blockdiag", lanes_in=lanes_in, lanes_out=lanes_out,
                    w_slab=w_slab, b_slab=b_slab)
    else:
        # TODO(synk): at production, prefer F / K padded to multiples of 256 so
        # the 2x256x256 MXU on v6e/v7x is fully used per pass.
        def pad_w(w):
            K = w.shape[1]
            return jnp.pad(w, ((0, 0), (0, _round_up(K, LANE) - K))
                           ).astype(compute_dtype)

        def pad_b(b):
            K = b.reshape(-1).shape[0]
            return jnp.pad(b.reshape(1, K).astype(jnp.float32),
                           ((0, 0), (0, _round_up(K, LANE) - K)))

        prep.update(mode="perhead",
                    w_h=pad_w(w_h), w_o=pad_w(w_o), w_p=pad_w(w_p),
                    b_h=pad_b(b_h), b_o=pad_b(b_o), b_p=pad_b(b_p))
    return prep


# ----------------------------------------------------------------------------
# Kernels
# ----------------------------------------------------------------------------
def _heads_blockdiag_kernel(h_ref, o_ref, p_ref, w_ref, b_ref, out_ref):
    """Tiny-F path: one block-diagonal MXU dot computes all three heads."""
    tm, f = h_ref.shape
    lanes_in = w_ref.shape[0]
    parts = [h_ref[...], o_ref[...], p_ref[...]]
    if lanes_in > 3 * f:                                       # static branch
        parts.append(jnp.zeros((tm, lanes_in - 3 * f), h_ref.dtype))
    cat = jnp.concatenate(parts, axis=1).astype(w_ref.dtype)   # tm x <=128
    acc = jnp.dot(cat, w_ref[...], preferred_element_type=jnp.float32)
    out_ref[...] = (acc + b_ref[...]).astype(out_ref.dtype)


def _heads_perhead_kernel(h_ref, o_ref, p_ref, wh_ref, wo_ref, wp_ref,
                          bh_ref, bo_ref, bp_ref, oh_ref, oo_ref, op_ref):
    """Production-F path: per-head dots — no concat slab, no zero-block FLOPs."""
    cdt = wh_ref.dtype
    oh_ref[...] = (jnp.dot(h_ref[...].astype(cdt), wh_ref[...],
                           preferred_element_type=jnp.float32)
                   + bh_ref[...]).astype(oh_ref.dtype)
    oo_ref[...] = (jnp.dot(o_ref[...].astype(cdt), wo_ref[...],
                           preferred_element_type=jnp.float32)
                   + bo_ref[...]).astype(oo_ref.dtype)
    op_ref[...] = (jnp.dot(p_ref[...].astype(cdt), wp_ref[...],
                           preferred_element_type=jnp.float32)
                   + bp_ref[...]).astype(op_ref.dtype)


def _uniq_kernel(h_ref, o_ref, p_ref, u_ref):
    """all_unique_objects: concat + zero-pad of the first <=104 rows."""
    rows, f = h_ref.shape
    lanes = u_ref.shape[1]
    parts = [h_ref[...], o_ref[...], p_ref[...]]
    if lanes > 3 * f:                                          # static branch
        parts.append(jnp.zeros((rows, lanes - 3 * f), u_ref.dtype))
    u_ref[...] = jnp.concatenate(parts, axis=1)                # lane-dense store


# ----------------------------------------------------------------------------
# Fused forward of the inline compute
# ----------------------------------------------------------------------------
def fused_interaction_head(h, o, p, prep):
    """h, o, p: [N, F] features; prep: output of prepare_interaction_head_params.

    Returns (logits_h [N,Kh], logits_o [N,Ko], logits_p [N,Kp],
             all_unique_objects [1, 100, 3F]).
    """
    N, F = h.shape
    assert F == prep["F"]
    Kh, Ko, Kp = prep["Kh"], prep["Ko"], prep["Kp"]
    row_cap, vmem_limit = _tpu_tiling_config()

    # Row tiling: whole array if it fits, else balance the tile size so tail
    # padding stays minimal (never stream a nearly-empty last tile).
    if N <= row_cap:
        tm = _round_up(max(N, ROW_MULT), ROW_MULT)
        n_pad = tm
    else:
        n_tiles = pl.cdiv(N, row_cap)
        tm = _round_up(pl.cdiv(N, n_tiles), ROW_MULT)
        n_pad = tm * n_tiles
    grid = (n_pad // tm,)

    def pad_rows(x):
        return x if n_pad == N else jnp.pad(x, ((0, n_pad - N), (0, 0)))

    h_p, o_p, p_p = pad_rows(h), pad_rows(o), pad_rows(p)

    feat_spec = pl.BlockSpec((tm, F), lambda i: (i, 0))

    def const_spec(shape, single_buffer):
        # Grid-invariant operand: single-buffer it (double-buffering a constant
        # block only wastes VMEM — matters most on v7x's 64 MiB).
        if single_buffer:
            return pl.BlockSpec(shape, lambda i: (0, 0),
                                pipeline_mode=pl.Buffered(1))
        return pl.BlockSpec(shape, lambda i: (0, 0))

    cparams = pltpu.CompilerParams(
        # No resident outputs in this kernel -> the row axis is embarrassingly
        # parallel (lets v7x shard row tiles across its two TensorCores).
        dimension_semantics=("parallel",),
        vmem_limit_bytes=vmem_limit,
    )

    def run_logits(single_buffer):
        if prep["mode"] == "blockdiag":
            lanes_out = prep["lanes_out"]
            out = pl.pallas_call(
                _heads_blockdiag_kernel,
                out_shape=jax.ShapeDtypeStruct((n_pad, lanes_out), h.dtype),
                grid_spec=pltpu.PrefetchScalarGridSpec(
                    num_scalar_prefetch=0,
                    grid=grid,
                    in_specs=[feat_spec, feat_spec, feat_spec,
                              const_spec((prep["lanes_in"], lanes_out),
                                         single_buffer),
                              const_spec((1, lanes_out), single_buffer)],
                    out_specs=pl.BlockSpec((tm, lanes_out), lambda i: (i, 0)),
                ),
                compiler_params=cparams,
            )(h_p, o_p, p_p, prep["w_slab"], prep["b_slab"])
            return (out[:N, 0:Kh],
                    out[:N, Kh:Kh + Ko],
                    out[:N, Kh + Ko:Kh + Ko + Kp])
        else:
            Khp = prep["w_h"].shape[1]
            Kop = prep["w_o"].shape[1]
            Kpp = prep["w_p"].shape[1]
            oh, oo, opp = pl.pallas_call(
                _heads_perhead_kernel,
                out_shape=(jax.ShapeDtypeStruct((n_pad, Khp), h.dtype),
                           jax.ShapeDtypeStruct((n_pad, Kop), h.dtype),
                           jax.ShapeDtypeStruct((n_pad, Kpp), h.dtype)),
                grid_spec=pltpu.PrefetchScalarGridSpec(
                    num_scalar_prefetch=0,
                    grid=grid,
                    in_specs=[feat_spec, feat_spec, feat_spec,
                              const_spec((F, Khp), single_buffer),
                              const_spec((F, Kop), single_buffer),
                              const_spec((F, Kpp), single_buffer),
                              const_spec((1, Khp), single_buffer),
                              const_spec((1, Kop), single_buffer),
                              const_spec((1, Kpp), single_buffer)],
                    out_specs=(pl.BlockSpec((tm, Khp), lambda i: (i, 0)),
                               pl.BlockSpec((tm, Kop), lambda i: (i, 0)),
                               pl.BlockSpec((tm, Kpp), lambda i: (i, 0))),
                ),
                compiler_params=cparams,
            )(h_p, o_p, p_p, prep["w_h"], prep["w_o"], prep["w_p"],
              prep["b_h"], prep["b_o"], prep["b_p"])
            return oh[:N, 0:Kh], oo[:N, 0:Ko], opp[:N, 0:Kp]

    try:
        logits_h, logits_o, logits_p = run_logits(True)
    except Exception:
        # pl.Buffered(1) pipeline hint rejected by this jax build: fall back to
        # default double-buffering of the constant operands (correctness same).
        logits_h, logits_o, logits_p = run_logits(False)

    # all_unique_objects: a <=104-row copy kept OUT of the row-tiled kernel so
    # the row axis above can stay "parallel".
    max_pad = _round_up(MAX_UNIQUE, 8)                 # 104
    lanes_u = _round_up(3 * F, LANE)

    def first_rows(x_p):
        n = x_p.shape[0]
        if n >= max_pad:
            return x_p[:max_pad]                        # N > 100 truncation
        return jnp.pad(x_p, ((0, max_pad - n), (0, 0)))  # zero-pad to 104

    h_u, o_u, p_u = first_rows(h_p), first_rows(o_p), first_rows(p_p)

    uniq = pl.pallas_call(
        _uniq_kernel,
        out_shape=jax.ShapeDtypeStruct((max_pad, lanes_u), h.dtype),
        grid_spec=pltpu.PrefetchScalarGridSpec(
            num_scalar_prefetch=0,
            grid=(1,),
            in_specs=[pl.BlockSpec((max_pad, F), lambda i: (0, 0))] * 3,
            out_specs=pl.BlockSpec((max_pad, lanes_u), lambda i: (0, 0)),
        ),
        compiler_params=pltpu.CompilerParams(
            dimension_semantics=("arbitrary",)),
    )(h_u, o_u, p_u)

    all_unique = uniq[:MAX_UNIQUE, :3 * F][None, ...]   # [1, 100, 3F]
    return logits_h, logits_o, logits_p, all_unique


# ----------------------------------------------------------------------------
# InteractionHead forward (synthetic): opaque sub-modules' outputs are taken as
# inputs; the inline compute runs through the fused Pallas kernels.
# ----------------------------------------------------------------------------
def interaction_head_forward(box_h_features, box_o_features, box_pair_features,
                             prepared_params, num_boxes_per_image):
    logits_h, logits_o, logits_p, all_unique_objects = fused_interaction_head(
        box_h_features, box_o_features, box_pair_features, prepared_params)
    # TODO(synk): rel_transformer_head is an external nn.Module with unknown
    # internals; identity pass-through on (h, o, pair) features here.

    # postprocess: split per image (single reshape when pair counts are equal).
    n_imgs = len(num_boxes_per_image)
    if n_imgs > 0 and len(set(num_boxes_per_image)) == 1:
        n = num_boxes_per_image[0]
        sh = logits_h.reshape(n_imgs, n, -1)
        so = logits_o.reshape(n_imgs, n, -1)
        sp = logits_p.reshape(n_imgs, n, -1)
        results = [dict(scores_h=sh[i], scores_o=so[i], scores_p=sp[i])
                   for i in range(n_imgs)]
    else:
        results, start = [], 0
        for n in num_boxes_per_image:
            results.append(dict(scores_h=logits_h[start:start + n],
                                scores_o=logits_o[start:start + n],
                                scores_p=logits_p[start:start + n]))
            start += n
    return results, all_unique_objects


# ----------------------------------------------------------------------------
# Deterministic example inputs + correctness checks
# ----------------------------------------------------------------------------
def _run_case(key, num_boxes_per_image, F, K_obj, K_p):
    N = sum(num_boxes_per_image)
    k1, k2, k3, k4, k5, k6 = jax.random.split(key, 6)
    h = jax.random.normal(k1, (N, F), dtype=jnp.float32)
    o = jax.random.normal(k2, (N, F), dtype=jnp.float32)
    p = jax.random.normal(k3, (N, F), dtype=jnp.float32)
    params = dict(
        w_h=0.05 * jax.random.normal(k4, (F, K_obj), dtype=jnp.float32),
        b_h=0.01 * jnp.ones((1, K_obj), dtype=jnp.float32),
        w_o=0.05 * jax.random.normal(k5, (F, K_obj), dtype=jnp.float32),
        b_o=0.02 * jnp.ones((1, K_obj), dtype=jnp.float32),
        w_p=0.05 * jax.random.normal(k6, (F, K_p), dtype=jnp.float32),
        b_p=0.03 * jnp.ones((1, K_p), dtype=jnp.float32),
    )
    prep = prepare_interaction_head_params(params)   # hoisted: once per model

    results, all_unique = interaction_head_forward(
        h, o, p, prep, num_boxes_per_image)
    jax.block_until_ready(all_unique)
    for r in results:
        jax.block_until_ready(r["scores_h"])
        jax.block_until_ready(r["scores_o"])
        jax.block_until_ready(r["scores_p"])

    # Reference: f32 math on bf16-rounded operands (matches bf16-MXU + f32 acc).
    def ref_head(x, w, b):
        xr = x.astype(jnp.bfloat16).astype(jnp.float32)
        wr = w.astype(jnp.bfloat16).astype(jnp.float32)
        return jnp.dot(xr, wr, precision=jax.lax.Precision.HIGHEST) + b

    ref_h = ref_head(h, params["w_h"], params["b_h"])
    ref_o = ref_head(o, params["w_o"], params["b_o"])
    ref_p = ref_head(p, params["w_p"], params["b_p"])
    cat = jnp.concatenate([h, o, p], axis=1)
    ref_uniq = jnp.zeros((MAX_UNIQUE, 3 * F), jnp.float32).at[
        :min(N, MAX_UNIQUE)].set(cat[:MAX_UNIQUE])

    got_h = jnp.concatenate([r["scores_h"] for r in results])
    got_o = jnp.concatenate([r["scores_o"] for r in results])
    got_p = jnp.concatenate([r["scores_p"] for r in results])
    assert got_h.shape == (N, K_obj) and got_p.shape == (N, K_p)
    assert all_unique.shape == (1, MAX_UNIQUE, 3 * F)
    assert jnp.allclose(got_h, ref_h, atol=1e-4)
    assert jnp.allclose(got_o, ref_o, atol=1e-4)
    assert jnp.allclose(got_p, ref_p, atol=1e-4)
    assert jnp.allclose(all_unique[0], ref_uniq, atol=1e-6)


if __name__ == "__main__":
    key = jax.random.PRNGKey(0)
    k1, k2, k3 = jax.random.split(key, 3)

    # 1) small: 2 images x 4 pairs, F=32 -> block-diagonal path, N < 100
    _run_case(k1, [4, 4], F=32, K_obj=16, K_p=24)
    # 2) truncation + multi-tile: N=1100 (> 100 and > row-tile cap), unequal split
    _run_case(k2, [600, 500], F=32, K_obj=16, K_p=24)
    # 3) per-head-dot path: F=128 (above block-diagonal threshold)
    _run_case(k3, [12, 12], F=128, K_obj=16, K_p=24)

    print("KERNEL_OK")
</pallas_src>

<mosaic_0001>
module attributes {stable_mosaic.version = 11 : i64} {
  func.func @_heads_blockdiag_kernel(%arg0: i32, %arg1: memref<16x32xf32, #tpu.memory_space<vmem>>, %arg2: memref<16x32xf32, #tpu.memory_space<vmem>>, %arg3: memref<16x32xf32, #tpu.memory_space<vmem>>, %arg4: memref<128x128xbf16, #tpu.memory_space<vmem>>, %arg5: memref<1x128xf32, #tpu.memory_space<vmem>>, %arg6: memref<16x128xf32, #tpu.memory_space<vmem>>) attributes {dimension_semantics = [#tpu.dimension_semantics<parallel>], iteration_bounds = array<i64: 1>, scalar_prefetch = 0 : i64, scratch_operands = 0 : i64, tpu.core_type = #tpu.core_type<tc>, window_params = [{transform_indices = @transform_0, window_bounds = array<i64: 16, 32>}, {transform_indices = @transform_1, window_bounds = array<i64: 16, 32>}, {transform_indices = @transform_2, window_bounds = array<i64: 16, 32>}, {pipeline_mode = #tpu.pipeline_mode<synchronous>, transform_indices = @transform_3, window_bounds = array<i64: 128, 128>}, {pipeline_mode = #tpu.pipeline_mode<synchronous>, transform_indices = @transform_4, window_bounds = array<i64: 1, 128>}, {transform_indices = @transform_5, window_bounds = array<i64: 16, 128>}]} {
    %c0 = arith.constant 0 : index
    %c0_0 = arith.constant 0 : index
    %0 = vector.load %arg1[%c0, %c0_0] : memref<16x32xf32, #tpu.memory_space<vmem>>, vector<16x32xf32>
    %c0_1 = arith.constant 0 : index
    %c0_2 = arith.constant 0 : index
    %1 = vector.load %arg2[%c0_1, %c0_2] : memref<16x32xf32, #tpu.memory_space<vmem>>, vector<16x32xf32>
    %c0_3 = arith.constant 0 : index
    %c0_4 = arith.constant 0 : index
    %2 = vector.load %arg3[%c0_3, %c0_4] : memref<16x32xf32, #tpu.memory_space<vmem>>, vector<16x32xf32>
    %cst = arith.constant 0.000000e+00 : f32
    %3 = vector.broadcast %cst : f32 to vector<16x32xf32>
    %4 = tpu.concatenate %0, %1, %2, %3 in 1 : vector<16x32xf32>, vector<16x32xf32>, vector<16x32xf32>, vector<16x32xf32> -> vector<16x128xf32>
    %5 = arith.truncf %4 : vector<16x128xf32> to vector<16x128xbf16>
    %c0_5 = arith.constant 0 : index
    %c0_6 = arith.constant 0 : index
    %6 = vector.load %arg4[%c0_5, %c0_6] : memref<128x128xbf16, #tpu.memory_space<vmem>>, vector<128x128xbf16>
    %cst_7 = arith.constant dense<0.000000e+00> : vector<16x128xf32>
    %7 = tpu.matmul %5, %6, %cst_7 {dimension_numbers = #tpu.dot_dimension_numbers<[1], [0], [0], [1], [0, 0, 1, 1], [], []>} : vector<16x128xbf16>, vector<128x128xbf16>, vector<16x128xf32> -> vector<16x128xf32>
    %c0_8 = arith.constant 0 : index
    %c0_9 = arith.constant 0 : index
    %8 = vector.load %arg5[%c0_8, %c0_9] : memref<1x128xf32, #tpu.memory_space<vmem>>, vector<1x128xf32>
    %9 = vector.broadcast %8 : vector<1x128xf32> to vector<16x128xf32>
    %10 = arith.addf %7, %9 : vector<16x128xf32>
    %c0_10 = arith.constant 0 : index
    %c0_11 = arith.constant 0 : index
    %11 = vector.load %arg6[%c0_10, %c0_11] : memref<16x128xf32, #tpu.memory_space<vmem>>, vector<16x128xf32>
    tpu.vector_store %arg6[%c0_10, %c0_11], %10 {strides = array<i32>} : memref<16x128xf32, #tpu.memory_space<vmem>>, vector<16x128xf32>,
    return
  }
  func.func @transform_0(%arg0: i32) -> (i32, i32) {
    %c0_i32 = arith.constant 0 : i32
    %c0_i32_0 = arith.constant 0 : i32
    return %arg0, %c0_i32 : i32, i32
  }
  func.func @transform_1(%arg0: i32) -> (i32, i32) {
    %c0_i32 = arith.constant 0 : i32
    %c0_i32_0 = arith.constant 0 : i32
    return %arg0, %c0_i32 : i32, i32
  }
  func.func @transform_2(%arg0: i32) -> (i32, i32) {
    %c0_i32 = arith.constant 0 : i32
    %c0_i32_0 = arith.constant 0 : i32
    return %arg0, %c0_i32 : i32, i32
  }
  func.func @transform_3(%arg0: i32) -> (i32, i32) {
    %c0_i32 = arith.constant 0 : i32
    %c0_i32_0 = arith.constant 0 : i32
    %c0_i32_1 = arith.constant 0 : i32
    return %c0_i32, %c0_i32_0 : i32, i32
  }
  func.func @transform_4(%arg0: i32) -> (i32, i32) {
    %c0_i32 = arith.constant 0 : i32
    %c0_i32_0 = arith.constant 0 : i32
    %c0_i32_1 = arith.constant 0 : i32
    return %c0_i32, %c0_i32_0 : i32, i32
  }
  func.func @transform_5(%arg0: i32) -> (i32, i32) {
    %c0_i32 = arith.constant 0 : i32
    %c0_i32_0 = arith.constant 0 : i32
    return %arg0, %c0_i32 : i32, i32
  }
}

module attributes {stable_mosaic.version = 11 : i64} {
  func.func @_heads_blockdiag_kernel(%arg0: i32, %arg1: memref<16x32xf32, #tpu.memory_space<vmem>>, %arg2: memref<16x32xf32, #tpu.memory_space<vmem>>, %arg3: memref<16x32xf32, #tpu.memory_space<vmem>>, %arg4: memref<128x128xbf16, #tpu.memory_space<vmem>>, %arg5: memref<1x128xf32, #tpu.memory_space<vmem>>, %arg6: memref<16x128xf32, #tpu.memory_space<vmem>>) attributes {dimension_semantics = [#tpu.dimension_semantics<parallel>], iteration_bounds = array<i64: 1>, scalar_prefetch = 0 : i64, scratch_operands = 0 : i64, tpu.core_type = #tpu.core_type<tc>, window_params = [{transform_indices = @transform_0, window_bounds = array<i64: 16, 32>}, {transform_indices = @transform_1, window_bounds = array<i64: 16, 32>}, {transform_indices = @transform_2, window_bounds = array<i64: 16, 32>}, {pipeline_mode = #tpu.pipeline_mode<synchronous>, transform_indices = @transform_3, window_bounds = array<i64: 128, 128>}, {pipeline_mode = #tpu.pipeline_mode<synchronous>, transform_indices = @transform_4, window_bounds = array<i64: 1, 128>}, {transform_indices = @transform_5, window_bounds = array<i64: 16, 128>}]} {
    %c0 = arith.constant 0 : index
    %c0_0 = arith.constant 0 : index
    %0 = vector.load %arg1[%c0, %c0_0] : memref<16x32xf32, #tpu.memory_space<vmem>>, vector<16x32xf32>
    %c0_1 = arith.constant 0 : index
    %c0_2 = arith.constant 0 : index
    %1 = vector.load %arg2[%c0_1, %c0_2] : memref<16x32xf32, #tpu.memory_space<vmem>>, vector<16x32xf32>
    %c0_3 = arith.constant 0 : index
    %c0_4 = arith.constant 0 : index
    %2 = vector.load %arg3[%c0_3, %c0_4] : memref<16x32xf32, #tpu.memory_space<vmem>>, vector<16x32xf32>
    %cst = arith.constant 0.000000e+00 : f32
    %3 = vector.broadcast %cst : f32 to vector<16x32xf32>
    %4 = tpu.concatenate %0, %1, %2, %3 in 1 : vector<16x32xf32>, vector<16x32xf32>, vector<16x32xf32>, vector<16x32xf32> -> vector<16x128xf32>
    %5 = arith.truncf %4 : vector<16x128xf32> to vector<16x128xbf16>
    %c0_5 = arith.constant 0 : index
    %c0_6 = arith.constant 0 : index
    %6 = vector.load %arg4[%c0_5, %c0_6] : memref<128x128xbf16, #tpu.memory_space<vmem>>, vector<128x128xbf16>
    %cst_7 = arith.constant dense<0.000000e+00> : vector<16x128xf32>
    %7 = tpu.matmul %5, %6, %cst_7 {dimension_numbers = #tpu.dot_dimension_numbers<[1], [0], [0], [1], [0, 0, 1, 1], [], []>} : vector<16x128xbf16>, vector<128x128xbf16>, vector<16x128xf32> -> vector<16x128xf32>
    %c0_8 = arith.constant 0 : index
    %c0_9 = arith.constant 0 : index
    %8 = vector.load %arg5[%c0_8, %c0_9] : memref<1x128xf32, #tpu.memory_space<vmem>>, vector<1x128xf32>
    %9 = vector.broadcast %8 : vector<1x128xf32> to vector<16x128xf32>
    %10 = arith.addf %7, %9 : vector<16x128xf32>
    %c0_10 = arith.constant 0 : index
    %c0_11 = arith.constant 0 : index
    %11 = vector.load %arg6[%c0_10, %c0_11] : memref<16x128xf32, #tpu.memory_space<vmem>>, vector<16x128xf32>
    tpu.vector_store %arg6[%c0_10, %c0_11], %10 {strides = array<i32>} : memref<16x128xf32, #tpu.memory_space<vmem>>, vector<16x128xf32>,
    return
  }
  func.func @transform_0(%arg0: i32) -> (i32, i32) {
    %c0_i32 = arith.constant 0 : i32
    %c0_i32_0 = arith.constant 0 : i32
    return %arg0, %c0_i32 : i32, i32
  }
  func.func @transform_1(%arg0: i32) -> (i32, i32) {
    %c0_i32 = arith.constant 0 : i32
    %c0_i32_0 = arith.constant 0 : i32
    return %arg0, %c0_i32 : i32, i32
  }
  func.func @transform_2(%arg0: i32) -> (i32, i32) {
    %c0_i32 = arith.constant 0 : i32
    %c0_i32_0 = arith.constant 0 : i32
    return %arg0, %c0_i32 : i32, i32
  }
  func.func @transform_3(%arg0: i32) -> (i32, i32) {
    %c0_i32 = arith.constant 0 : i32
    %c0_i32_0 = arith.constant 0 : i32
    %c0_i32_1 = arith.constant 0 : i32
    return %c0_i32, %c0_i32_0 : i32, i32
  }
  func.func @transform_4(%arg0: i32) -> (i32, i32) {
    %c0_i32 = arith.constant 0 : i32
    %c0_i32_0 = arith.constant 0 : i32
    %c0_i32_1 = arith.constant 0 : i32
    return %c0_i32, %c0_i32_0 : i32, i32
  }
  func.func @transform_5(%arg0: i32) -> (i32, i32) {
    %c0_i32 = arith.constant 0 : i32
    %c0_i32_0 = arith.constant 0 : i32
    return %arg0, %c0_i32 : i32, i32
  }
}

</mosaic_0001>

<llo_original>
// kernel: tpu_custom_call.1
$region0: #{tpu_custom_call.1}
  #allocation0 [shape = 'u32[]', space=smem, size = 0x4, offset = 0x4, fixed_abs, tag = 'smem constant byte address 0x4 - core index']
  #allocation1 [shape = 'u32[144,128]{1,0:T(1,128)}', space=vmem, size = 0x12000, scoped, tag = 'internal scratch']
  %s0 = inlined_call_operand.hbm [shape: f32[16,32], index: 0, kind: input, shape index: {}]
  %s1 = inlined_call_operand.hbm [shape: f32[16,32], index: 1, kind: input, shape index: {}]
  %s2 = inlined_call_operand.hbm [shape: f32[16,32], index: 2, kind: input, shape index: {}]
  %s3 = inlined_call_operand.hbm [shape: bf16[128,128], index: 3, kind: input, shape index: {}]
  %s4 = inlined_call_operand.vmem [shape: f32[1,128], index: 4, kind: input, shape index: {}]
  %s5 = inlined_call_operand.hbm [shape: f32[16,128], index: 5, kind: output, shape index: {}]
  %s6 = sld [smem:[#allocation0]]
  $region46: #{tpu_custom_call.1} parent=0
    _
  %s8 = ssub.s32 1, %s6
  %s9 = scalar_select 0, %s8, %s6
  $region1: #{tpu_custom_call.1} parent=0
    #allocation2 [shape = 'u8[8192]{0}', space=vmem, size = 0x2000, scoped, tag = 'input window, operand 0, single buffered']
    #allocation3 [shape = 's32[1]{0}', space=sflag, size = 0x4, scoped, tag = 'scoped memory for tpu_custom_call.1']
    #allocation4 [shape = 's32[1]{0}', space=sflag, size = 0x4, scoped, tag = 'scoped memory for tpu_custom_call.1']
    #allocation5 [shape = 'u8[8192]{0}', space=vmem, size = 0x2000, scoped, tag = 'input window, operand 1, single buffered']
    #allocation6 [shape = 's32[1]{0}', space=sflag, size = 0x4, scoped, tag = 'scoped memory for tpu_custom_call.1']
    #allocation7 [shape = 'u8[8192]{0}', space=vmem, size = 0x2000, scoped, tag = 'input window, operand 2, single buffered']
    #allocation8 [shape = 'u8[32768]{0}', space=vmem, size = 0x8000, scoped, tag = 'input window, operand 3, single buffered']
    #allocation9 [shape = 's32[1]{0}', space=sflag, size = 0x4, scoped, tag = 'scoped memory for tpu_custom_call.1']
    #allocation10 [shape = 'u8[8192]{0}', space=vmem, size = 0x2000, scoped, tag = 'output window, operand 0, single buffered']
    %10 = vsyncpa [#allocation3], 0
    %11 = vsyncpa [#allocation6], 0
    %12 = vsyncpa [#allocation9], 0
    %13 = vsyncpa [#allocation4], 0
    // Predicated region
    $region2: #{tpu_custom_call.1} parent=1 // pred_check
      _
    $region3: #{tpu_custom_call.1} parent=1 // pred_check_branch
      %15 = sbr.rel (0) target = $region5
    $region4: #{tpu_custom_call.1} parent=1 // pred_region
      %s17 = ssub.s32 256, 256
      %18 = vsyncadd [#allocation3], %s17
      %s19 = sshll.u32 [#allocation2], 4
      %s20 = int_to_ptr.vmem [resolvable:$true] %s19
      %25 = dma.hbm_to_vmem [thread:$0]  %s0, 256, %s20, [#allocation3], 128, 128, 8
    $region5: #{tpu_custom_call.1} parent=1 // pred_fallthru
      _
    // Predicated region
    $region6: #{tpu_custom_call.1} parent=1 // pred_check
      _
    $region7: #{tpu_custom_call.1} parent=1 // pred_check_branch
      %27 = sbr.rel (0) target = $region9
    $region8: #{tpu_custom_call.1} parent=1 // pred_region
      %s29 = ssub.s32 256, 256
      %30 = vsyncadd [#allocation6], %s29
      %s31 = sshll.u32 [#allocation5], 4
      %s32 = int_to_ptr.vmem [resolvable:$true] %s31
      %37 = dma.hbm_to_vmem [thread:$0]  %s1, 256, %s32, [#allocation6], 128, 128, 8
    $region9: #{tpu_custom_call.1} parent=1 // pred_fallthru
      _
    // Predicated region
    $region10: #{tpu_custom_call.1} parent=1 // pred_check
      _
    $region11: #{tpu_custom_call.1} parent=1 // pred_check_branch
      %39 = sbr.rel (0) target = $region13
    $region12: #{tpu_custom_call.1} parent=1 // pred_region
      %s41 = ssub.s32 256, 256
      %42 = vsyncadd [#allocation6], %s41
      %s43 = sshll.u32 [#allocation7], 4
      %s44 = int_to_ptr.vmem [resolvable:$true] %s43
      %49 = dma.hbm_to_vmem [thread:$0]  %s2, 256, %s44, [#allocation6], 128, 128, 8
    $region13: #{tpu_custom_call.1} parent=1 // pred_fallthru
      _
    // Predicated region
    $region14: #{tpu_custom_call.1} parent=1 // pred_check
      _
    $region15: #{tpu_custom_call.1} parent=1 // pred_check_branch
      %51 = sbr.rel (0) target = $region17
    $region16: #{tpu_custom_call.1} parent=1 // pred_region
      %s53 = ssub.s32 1024, 1024
      %54 = vsyncadd [#allocation9], %s53
      %s55 = sshll.u32 [#allocation8], 4
      %s56 = int_to_ptr.vmem [resolvable:$true] %s55
      %61 = dma.hbm_to_vmem [thread:$0]  %s3, 1024, %s56, [#allocation9], 64, 64, 4
    $region17: #{tpu_custom_call.1} parent=1 // pred_fallthru
      _
    // Predicated region
    $region18: #{tpu_custom_call.1} parent=1 // pred_check
      _
    $region19: #{tpu_custom_call.1} parent=1 // pred_check_branch
      %63 = sbr.rel (0) target = $region21
    $region20: #{tpu_custom_call.1} parent=1 // pred_region
      _
    $region21: #{tpu_custom_call.1} parent=1 // pred_fallthru
      _
    // Predicated region
    $region22: #{tpu_custom_call.1} parent=1 // pred_check
      _
    $region23: #{tpu_custom_call.1} parent=1 // pred_check_branch
      %65 = sbr.rel (0) target = $region25
    $region24: #{tpu_custom_call.1} parent=1 // pred_region
      %66 = dma.done [#allocation3], 256
    $region25: #{tpu_custom_call.1} parent=1 // pred_fallthru
      _
    // Predicated region
    $region26: #{tpu_custom_call.1} parent=1 // pred_check
      _
    $region27: #{tpu_custom_call.1} parent=1 // pred_check_branch
      %68 = sbr.rel (0) target = $region29
    $region28: #{tpu_custom_call.1} parent=1 // pred_region
      %69 = dma.done [#allocation6], 256
    $region29: #{tpu_custom_call.1} parent=1 // pred_fallthru
      _
    // Predicated region
    $region30: #{tpu_custom_call.1} parent=1 // pred_check
      _
    $region31: #{tpu_custom_call.1} parent=1 // pred_check_branch
      %71 = sbr.rel (0) target = $region33
    $region32: #{tpu_custom_call.1} parent=1 // pred_region
      %72 = dma.done [#allocation6], 256
    $region33: #{tpu_custom_call.1} parent=1 // pred_fallthru
      _
    // Predicated region
    $region34: #{tpu_custom_call.1} parent=1 // pred_check
      _
    $region35: #{tpu_custom_call.1} parent=1 // pred_check_branch
      %74 = sbr.rel (0) target = $region37
    $region36: #{tpu_custom_call.1} parent=1 // pred_region
      %75 = dma.done [#allocation9], 1024
    $region37: #{tpu_custom_call.1} parent=1 // pred_fallthru
      _
    %v77 = vld [vmem:[#allocation2] sm:$0xff]
    %v78 = vld [vmem:[#allocation2 + $0x8] sm:$0xff]
    %v79 = vld [vmem:[#allocation5] sm:$0xff]
    %v80 = vld [vmem:[#allocation5 + $0x8] sm:$0xff]
    %v81 = vld [vmem:[#allocation7] sm:$0xff]
    %v82 = vld [vmem:[#allocation7 + $0x8] sm:$0xff]
    %85 = vrot.lane.b32.xlu0 %v79, 32
    %v86 = vpop.permute.xlu0 %85
    %87 = vrot.lane.b32.xlu0 %v80, 32
    %v88 = vpop.permute.xlu0 %87
    %93 = vrot.lane.b32.xlu0 %v81, 64
    %v94 = vpop.permute.xlu0 %93
    %95 = vrot.lane.b32.xlu0 %v82, 64
    %v96 = vpop.permute.xlu0 %95
    %vm99 = vcmask 261120
    %v100 = vsel %vm99, %v77, %v86
    %v101 = vsel %vm99, %v78, %v88
    %vm102 = vcmask 523264
    %v103 = vsel %vm102, %v100, %v94
    %v104 = vsel %vm102, %v101, %v96
    %vm105 = vcmask 785408
    %v106 = vsel %vm105, %v103, 0.0
    %v107 = vsel %vm105, %v104, 0.0
    %v108 = vpack.c.bf16 %v107, %v106
    %v109 = vld [vmem:[#allocation8] sm:$0xf]
    %v110 = vld [vmem:[#allocation8 + $0x4] sm:$0xf]
    %v111 = vld [vmem:[#allocation8 + $0x8] sm:$0xf]
    %v112 = vld [vmem:[#allocation8 + $0xc] sm:$0xf]
    %v113 = vld [vmem:[#allocation8 + $0x10] sm:$0xf]
    %v114 = vld [vmem:[#allocation8 + $0x14] sm:$0xf]
    %v115 = vld [vmem:[#allocation8 + $0x18] sm:$0xf]
    %v116 = vld [vmem:[#allocation8 + $0x1c] sm:$0xf]
    %v117 = vld [vmem:[#allocation8 + $0x20] sm:$0xf]
    %v118 = vld [vmem:[#allocation8 + $0x24] sm:$0xf]
    %v119 = vld [vmem:[#allocation8 + $0x28] sm:$0xf]
    %v120 = vld [vmem:[#allocation8 + $0x2c] sm:$0xf]
    %v121 = vld [vmem:[#allocation8 + $0x30] sm:$0xf]
    %v122 = vld [vmem:[#allocation8 + $0x34] sm:$0xf]
    %v123 = vld [vmem:[#allocation8 + $0x38] sm:$0xf]
    %v124 = vld [vmem:[#allocation8 + $0x3c] sm:$0xf]
    %v125 = vld [vmem:[%s4] sm:$0x1]
    %v127 = vlaneseq
    %v128 = vshrl.u32 %v127, 7
    %v129 = vsub.s32 0, %v128
    %v130 = vrot.slane %v125, %v129
    %v148 = vunpack.c.l.b16 %v109
    %v149 = vunpack.c.l.b16 %v110
    %v150 = vunpack.c.l.b16 %v111
    %v151 = vunpack.c.l.b16 %v112
    %v152 = vunpack.c.l.b16 %v113
    %v153 = vunpack.c.l.b16 %v114
    %v154 = vunpack.c.l.b16 %v115
    %v155 = vunpack.c.l.b16 %v116
    %v156 = vunpack.c.l.b16 %v117
    %v157 = vunpack.c.l.b16 %v118
    %v158 = vunpack.c.l.b16 %v119
    %v159 = vunpack.c.l.b16 %v120
    %v160 = vunpack.c.l.b16 %v121
    %v161 = vunpack.c.l.b16 %v122
    %v162 = vunpack.c.l.b16 %v123
    %v163 = vunpack.c.l.b16 %v124
    %v164 = vpack.c.b16 %v149, %v148
    %v165 = vpack.c.b16 %v151, %v150
    %v166 = vpack.c.b16 %v153, %v152
    %v167 = vpack.c.b16 %v155, %v154
    %v168 = vpack.c.b16 %v157, %v156
    %v169 = vpack.c.b16 %v159, %v158
    %v170 = vpack.c.b16 %v161, %v160
    %v171 = vpack.c.b16 %v163, %v162
    %180 = vmatprep.subr.bf16.mxu0 0
    %181 = vmatpush1.bf16.msra.mxu0 %v164
    %182 = vmatprep.subr.bf16.mxu0 0
    %183 = vmatpush1.bf16.msra.mxu0 %v165
    %184 = vmatprep.subr.bf16.mxu0 0
    %185 = vmatpush1.bf16.msra.mxu0 %v166
    %186 = vmatprep.subr.bf16.mxu0 0
    %187 = vmatpush1.bf16.msra.mxu0 %v167
    %188 = vmatprep.subr.bf16.mxu0 0
    %189 = vmatpush1.bf16.msra.mxu0 %v168
    %190 = vmatprep.subr.bf16.mxu0 0
    %191 = vmatpush1.bf16.msra.mxu0 %v169
    %192 = vmatprep.subr.bf16.mxu0 0
    %193 = vmatpush1.bf16.msra.mxu0 %v170
    %194 = vmatprep.subr.bf16.mxu0 0
    %195 = vmatpush1.bf16.msra.mxu0 %v171
    %196 = vmatprep.subr.bf16.mxu0 0
    %197 = vmatpush1.bf16.msra.mxu0 0
    %198 = vmatprep.subr.bf16.mxu0 0
    %199 = vmatpush1.bf16.msra.mxu0 0
    %200 = vmatprep.subr.bf16.mxu0 0
    %201 = vmatpush1.bf16.msra.mxu0 0
    %202 = vmatprep.subr.bf16.mxu0 0
    %203 = vmatpush1.bf16.msra.mxu0 0
    %204 = vmatprep.subr.bf16.mxu0 0
    %205 = vmatpush1.bf16.msra.mxu0 0
    %206 = vmatprep.subr.bf16.mxu0 0
    %207 = vmatpush1.bf16.msra.mxu0 0
    %208 = vmatprep.subr.bf16.mxu0 0
    %209 = vmatpush1.bf16.msra.mxu0 0
    %210 = vmatprep.subr.bf16.mxu0 0
    %211 = vmatpush1.bf16.msra.mxu0 0
    %212 = vmatprep.mubr.bf16.mxu0 0
    %213 = vmatmul.mubr.bf16.gmra.mrb[0].mxu0 %v108
    %v214 = vpop.f32.mrb[0].mxu0
    %v215 = vadd.f32 %v130, %v214
    %v216 = vpop.f32.mrb[0].mxu0
    %v217 = vpop.f32.mrb[0].mxu0
    %v218 = vadd.f32 %v130, %v217
    %v219 = vpop.f32.mrb[0].mxu0
    %220 = vdwg.mxu0
    %221 = vst [vmem:[#allocation10] sm:$0xff] %v215
    %222 = vst [vmem:[#allocation10 + $0x8] sm:$0xff] %v218
    // Predicated region
    $region38: #{tpu_custom_call.1} parent=1 // pred_check
      _
    $region39: #{tpu_custom_call.1} parent=1 // pred_check_branch
      %224 = sbr.rel (0) target = $region41
    $region40: #{tpu_custom_call.1} parent=1 // pred_region
      %s226 = ssub.s32 256, 256
      %227 = vsyncadd [#allocation4], %s226
      %s228 = sshll.u32 [#allocation10], 4
      %s229 = int_to_ptr.vmem [resolvable:$true] %s228
      %234 = dma.vmem_to_hbm [thread:$0]  %s229, 256, %s5, [#allocation4], 128, 128, 8
    $region41: #{tpu_custom_call.1} parent=1 // pred_fallthru
      _
    // Predicated region
    $region42: #{tpu_custom_call.1} parent=1 // pred_check
      _
    $region43: #{tpu_custom_call.1} parent=1 // pred_check_branch
      %236 = sbr.rel (0) target = $region45
    $region44: #{tpu_custom_call.1} parent=1 // pred_region
      %237 = dma.done [#allocation4], 256
    $region45: #{tpu_custom_call.1} parent=1 // pred_fallthru
      _
    %238 = vsyncpa [#allocation3], 1
    %239 = vsyncpa [#allocation6], 1
    %240 = vsyncpa [#allocation9], 1
    %241 = vsyncpa [#allocation4], 1

// kernel: tpu_custom_call.1
$region0: #{tpu_custom_call.1}
  #allocation0 [shape = 'u32[]', space=smem, size = 0x4, offset = 0x4, fixed_abs, tag = 'smem constant byte address 0x4 - core index']
  #allocation1 [shape = 'u32[144,128]{1,0:T(1,128)}', space=vmem, size = 0x12000, scoped, tag = 'internal scratch']
  %s0 = inlined_call_operand.hbm [shape: f32[16,32], index: 0, kind: input, shape index: {}]
  %s1 = inlined_call_operand.hbm [shape: f32[16,32], index: 1, kind: input, shape index: {}]
  %s2 = inlined_call_operand.hbm [shape: f32[16,32], index: 2, kind: input, shape index: {}]
  %s3 = inlined_call_operand.hbm [shape: bf16[128,128], index: 3, kind: input, shape index: {}]
  %s4 = inlined_call_operand.vmem [shape: f32[1,128], index: 4, kind: input, shape index: {}]
  %s5 = inlined_call_operand.hbm [shape: f32[16,128], index: 5, kind: output, shape index: {}]
  %s6 = sld [smem:[#allocation0]]
  $region46: #{tpu_custom_call.1} parent=0
    _
  %s8 = ssub.s32 1, %s6
  %s9 = scalar_select 0, %s8, %s6
  $region1: #{tpu_custom_call.1} parent=0
    #allocation2 [shape = 'u8[8192]{0}', space=vmem, size = 0x2000, scoped, tag = 'input window, operand 0, single buffered']
    #allocation3 [shape = 's32[1]{0}', space=sflag, size = 0x4, scoped, tag = 'scoped memory for tpu_custom_call.1']
    #allocation4 [shape = 's32[1]{0}', space=sflag, size = 0x4, scoped, tag = 'scoped memory for tpu_custom_call.1']
    #allocation5 [shape = 'u8[8192]{0}', space=vmem, size = 0x2000, scoped, tag = 'input window, operand 1, single buffered']
    #allocation6 [shape = 's32[1]{0}', space=sflag, size = 0x4, scoped, tag = 'scoped memory for tpu_custom_call.1']
    #allocation7 [shape = 'u8[8192]{0}', space=vmem, size = 0x2000, scoped, tag = 'input window, operand 2, single buffered']
    #allocation8 [shape = 'u8[32768]{0}', space=vmem, size = 0x8000, scoped, tag = 'input window, operand 3, single buffered']
    #allocation9 [shape = 's32[1]{0}', space=sflag, size = 0x4, scoped, tag = 'scoped memory for tpu_custom_call.1']
    #allocation10 [shape = 'u8[8192]{0}', space=vmem, size = 0x2000, scoped, tag = 'output window, operand 0, single buffered']
    %10 = vsyncpa [#allocation3], 0
    %11 = vsyncpa [#allocation6], 0
    %12 = vsyncpa [#allocation9], 0
    %13 = vsyncpa [#allocation4], 0
    // Predicated region
    $region2: #{tpu_custom_call.1} parent=1 // pred_check
      _
    $region3: #{tpu_custom_call.1} parent=1 // pred_check_branch
      %15 = sbr.rel (0) target = $region5
    $region4: #{tpu_custom_call.1} parent=1 // pred_region
      %s17 = ssub.s32 256, 256
      %18 = vsyncadd [#allocation3], %s17
      %s19 = sshll.u32 [#allocation2], 4
      %s20 = int_to_ptr.vmem [resolvable:$true] %s19
      %25 = dma.hbm_to_vmem [thread:$0]  %s0, 256, %s20, [#allocation3], 128, 128, 8
    $region5: #{tpu_custom_call.1} parent=1 // pred_fallthru
      _
    // Predicated region
    $region6: #{tpu_custom_call.1} parent=1 // pred_check
      _
    $region7: #{tpu_custom_call.1} parent=1 // pred_check_branch
      %27 = sbr.rel (0) target = $region9
    $region8: #{tpu_custom_call.1} parent=1 // pred_region
      %s29 = ssub.s32 256, 256
      %30 = vsyncadd [#allocation6], %s29
      %s31 = sshll.u32 [#allocation5], 4
      %s32 = int_to_ptr.vmem [resolvable:$true] %s31
      %37 = dma.hbm_to_vmem [thread:$0]  %s1, 256, %s32, [#allocation6], 128, 128, 8
    $region9: #{tpu_custom_call.1} parent=1 // pred_fallthru
      _
    // Predicated region
    $region10: #{tpu_custom_call.1} parent=1 // pred_check
      _
    $region11: #{tpu_custom_call.1} parent=1 // pred_check_branch
      %39 = sbr.rel (0) target = $region13
    $region12: #{tpu_custom_call.1} parent=1 // pred_region
      %s41 = ssub.s32 256, 256
      %42 = vsyncadd [#allocation6], %s41
      %s43 = sshll.u32 [#allocation7], 4
      %s44 = int_to_ptr.vmem [resolvable:$true] %s43
      %49 = dma.hbm_to_vmem [thread:$0]  %s2, 256, %s44, [#allocation6], 128, 128, 8
    $region13: #{tpu_custom_call.1} parent=1 // pred_fallthru
      _
    // Predicated region
    $region14: #{tpu_custom_call.1} parent=1 // pred_check
      _
    $region15: #{tpu_custom_call.1} parent=1 // pred_check_branch
      %51 = sbr.rel (0) target = $region17
    $region16: #{tpu_custom_call.1} parent=1 // pred_region
      %s53 = ssub.s32 1024, 1024
      %54 = vsyncadd [#allocation9], %s53
      %s55 = sshll.u32 [#allocation8], 4
      %s56 = int_to_ptr.vmem [resolvable:$true] %s55
      %61 = dma.hbm_to_vmem [thread:$0]  %s3, 1024, %s56, [#allocation9], 64, 64, 4
    $region17: #{tpu_custom_call.1} parent=1 // pred_fallthru
      _
    // Predicated region
    $region18: #{tpu_custom_call.1} parent=1 // pred_check
      _
    $region19: #{tpu_custom_call.1} parent=1 // pred_check_branch
      %63 = sbr.rel (0) target = $region21
    $region20: #{tpu_custom_call.1} parent=1 // pred_region
      _
    $region21: #{tpu_custom_call.1} parent=1 // pred_fallthru
      _
    // Predicated region
    $region22: #{tpu_custom_call.1} parent=1 // pred_check
      _
    $region23: #{tpu_custom_call.1} parent=1 // pred_check_branch
      %65 = sbr.rel (0) target = $region25
    $region24: #{tpu_custom_call.1} parent=1 // pred_region
      %66 = dma.done [#allocation3], 256
    $region25: #{tpu_custom_call.1} parent=1 // pred_fallthru
      _
    // Predicated region
    $region26: #{tpu_custom_call.1} parent=1 // pred_check
      _
    $region27: #{tpu_custom_call.1} parent=1 // pred_check_branch
      %68 = sbr.rel (0) target = $region29
    $region28: #{tpu_custom_call.1} parent=1 // pred_region
      %69 = dma.done [#allocation6], 256
    $region29: #{tpu_custom_call.1} parent=1 // pred_fallthru
      _
    // Predicated region
    $region30: #{tpu_custom_call.1} parent=1 // pred_check
      _
    $region31: #{tpu_custom_call.1} parent=1 // pred_check_branch
      %71 = sbr.rel (0) target = $region33
    $region32: #{tpu_custom_call.1} parent=1 // pred_region
      %72 = dma.done [#allocation6], 256
    $region33: #{tpu_custom_call.1} parent=1 // pred_fallthru
      _
    // Predicated region
    $region34: #{tpu_custom_call.1} parent=1 // pred_check
      _
    $region35: #{tpu_custom_call.1} parent=1 // pred_check_branch
      %74 = sbr.rel (0) target = $region37
    $region36: #{tpu_custom_call.1} parent=1 // pred_region
      %75 = dma.done [#allocation9], 1024
    $region37: #{tpu_custom_call.1} parent=1 // pred_fallthru
      _
    %v77 = vld [vmem:[#allocation2] sm:$0xff]
    %v78 = vld [vmem:[#allocation2 + $0x8] sm:$0xff]
    %v79 = vld [vmem:[#allocation5] sm:$0xff]
    %v80 = vld [vmem:[#allocation5 + $0x8] sm:$0xff]
    %v81 = vld [vmem:[#allocation7] sm:$0xff]
    %v82 = vld [vmem:[#allocation7 + $0x8] sm:$0xff]
    %85 = vrot.lane.b32.xlu0 %v79, 32
    %v86 = vpop.permute.xlu0 %85
    %87 = vrot.lane.b32.xlu0 %v80, 32
    %v88 = vpop.permute.xlu0 %87
    %93 = vrot.lane.b32.xlu0 %v81, 64
    %v94 = vpop.permute.xlu0 %93
    %95 = vrot.lane.b32.xlu0 %v82, 64
    %v96 = vpop.permute.xlu0 %95
    %vm99 = vcmask 261120
    %v100 = vsel %vm99, %v77, %v86
    %v101 = vsel %vm99, %v78, %v88
    %vm102 = vcmask 523264
    %v103 = vsel %vm102, %v100, %v94
    %v104 = vsel %vm102, %v101, %v96
    %vm105 = vcmask 785408
    %v106 = vsel %vm105, %v103, 0.0
    %v107 = vsel %vm105, %v104, 0.0
    %v108 = vpack.c.bf16 %v107, %v106
    %v109 = vld [vmem:[#allocation8] sm:$0xf]
    %v110 = vld [vmem:[#allocation8 + $0x4] sm:$0xf]
    %v111 = vld [vmem:[#allocation8 + $0x8] sm:$0xf]
    %v112 = vld [vmem:[#allocation8 + $0xc] sm:$0xf]
    %v113 = vld [vmem:[#allocation8 + $0x10] sm:$0xf]
    %v114 = vld [vmem:[#allocation8 + $0x14] sm:$0xf]
    %v115 = vld [vmem:[#allocation8 + $0x18] sm:$0xf]
    %v116 = vld [vmem:[#allocation8 + $0x1c] sm:$0xf]
    %v117 = vld [vmem:[#allocation8 + $0x20] sm:$0xf]
    %v118 = vld [vmem:[#allocation8 + $0x24] sm:$0xf]
    %v119 = vld [vmem:[#allocation8 + $0x28] sm:$0xf]
    %v120 = vld [vmem:[#allocation8 + $0x2c] sm:$0xf]
    %v121 = vld [vmem:[#allocation8 + $0x30] sm:$0xf]
    %v122 = vld [vmem:[#allocation8 + $0x34] sm:$0xf]
    %v123 = vld [vmem:[#allocation8 + $0x38] sm:$0xf]
    %v124 = vld [vmem:[#allocation8 + $0x3c] sm:$0xf]
    %v125 = vld [vmem:[%s4] sm:$0x1]
    %v127 = vlaneseq
    %v128 = vshrl.u32 %v127, 7
    %v129 = vsub.s32 0, %v128
    %v130 = vrot.slane %v125, %v129
    %v148 = vunpack.c.l.b16 %v109
    %v149 = vunpack.c.l.b16 %v110
    %v150 = vunpack.c.l.b16 %v111
    %v151 = vunpack.c.l.b16 %v112
    %v152 = vunpack.c.l.b16 %v113
    %v153 = vunpack.c.l.b16 %v114
    %v154 = vunpack.c.l.b16 %v115
    %v155 = vunpack.c.l.b16 %v116
    %v156 = vunpack.c.l.b16 %v117
    %v157 = vunpack.c.l.b16 %v118
    %v158 = vunpack.c.l.b16 %v119
    %v159 = vunpack.c.l.b16 %v120
    %v160 = vunpack.c.l.b16 %v121
    %v161 = vunpack.c.l.b16 %v122
    %v162 = vunpack.c.l.b16 %v123
    %v163 = vunpack.c.l.b16 %v124
    %v164 = vpack.c.b16 %v149, %v148
    %v165 = vpack.c.b16 %v151, %v150
    %v166 = vpack.c.b16 %v153, %v152
    %v167 = vpack.c.b16 %v155, %v154
    %v168 = vpack.c.b16 %v157, %v156
    %v169 = vpack.c.b16 %v159, %v158
    %v170 = vpack.c.b16 %v161, %v160
    %v171 = vpack.c.b16 %v163, %v162
    %180 = vmatprep.subr.bf16.mxu0 0
    %181 = vmatpush1.bf16.msra.mxu0 %v164
    %182 = vmatprep.subr.bf16.mxu0 0
    %183 = vmatpush1.bf16.msra.mxu0 %v165
    %184 = vmatprep.subr.bf16.mxu0 0
    %185 = vmatpush1.bf16.msra.mxu0 %v166
    %186 = vmatprep.subr.bf16.mxu0 0
    %187 = vmatpush1.bf16.msra.mxu0 %v167
    %188 = vmatprep.subr.bf16.mxu0 0
    %189 = vmatpush1.bf16.msra.mxu0 %v168
    %190 = vmatprep.subr.bf16.mxu0 0
    %191 = vmatpush1.bf16.msra.mxu0 %v169
    %192 = vmatprep.subr.bf16.mxu0 0
    %193 = vmatpush1.bf16.msra.mxu0 %v170
    %194 = vmatprep.subr.bf16.mxu0 0
    %195 = vmatpush1.bf16.msra.mxu0 %v171
    %196 = vmatprep.subr.bf16.mxu0 0
    %197 = vmatpush1.bf16.msra.mxu0 0
    %198 = vmatprep.subr.bf16.mxu0 0
    %199 = vmatpush1.bf16.msra.mxu0 0
    %200 = vmatprep.subr.bf16.mxu0 0
    %201 = vmatpush1.bf16.msra.mxu0 0
    %202 = vmatprep.subr.bf16.mxu0 0
    %203 = vmatpush1.bf16.msra.mxu0 0
    %204 = vmatprep.subr.bf16.mxu0 0
    %205 = vmatpush1.bf16.msra.mxu0 0
    %206 = vmatprep.subr.bf16.mxu0 0
    %207 = vmatpush1.bf16.msra.mxu0 0
    %208 = vmatprep.subr.bf16.mxu0 0
    %209 = vmatpush1.bf16.msra.mxu0 0
    %210 = vmatprep.subr.bf16.mxu0 0
    %211 = vmatpush1.bf16.msra.mxu0 0
    %212 = vmatprep.mubr.bf16.mxu0 0
    %213 = vmatmul.mubr.bf16.gmra.mrb[0].mxu0 %v108
    %v214 = vpop.f32.mrb[0].mxu0
    %v215 = vadd.f32 %v130, %v214
    %v216 = vpop.f32.mrb[0].mxu0
    %v217 = vpop.f32.mrb[0].mxu0
    %v218 = vadd.f32 %v130, %v217
    %v219 = vpop.f32.mrb[0].mxu0
    %220 = vdwg.mxu0
    %221 = vst [vmem:[#allocation10] sm:$0xff] %v215
    %222 = vst [vmem:[#allocation10 + $0x8] sm:$0xff] %v218
    // Predicated region
    $region38: #{tpu_custom_call.1} parent=1 // pred_check
      _
    $region39: #{tpu_custom_call.1} parent=1 // pred_check_branch
      %224 = sbr.rel (0) target = $region41
    $region40: #{tpu_custom_call.1} parent=1 // pred_region
      %s226 = ssub.s32 256, 256
      %227 = vsyncadd [#allocation4], %s226
      %s228 = sshll.u32 [#allocation10], 4
      %s229 = int_to_ptr.vmem [resolvable:$true] %s228
      %234 = dma.vmem_to_hbm [thread:$0]  %s229, 256, %s5, [#allocation4], 128, 128, 8
    $region41: #{tpu_custom_call.1} parent=1 // pred_fallthru
      _
    // Predicated region
    $region42: #{tpu_custom_call.1} parent=1 // pred_check
      _
    $region43: #{tpu_custom_call.1} parent=1 // pred_check_branch
      %236 = sbr.rel (0) target = $region45
    $region44: #{tpu_custom_call.1} parent=1 // pred_region
      %237 = dma.done [#allocation4], 256
    $region45: #{tpu_custom_call.1} parent=1 // pred_fallthru
      _
    %238 = vsyncpa [#allocation3], 1
    %239 = vsyncpa [#allocation6], 1
    %240 = vsyncpa [#allocation9], 1
    %241 = vsyncpa [#allocation4], 1

</llo_original>
